<compile_context>
chip_gen: v6e
topology: v6e:2x2x1
jax: 0.10.0
libtpu: 0.0.40
codegen_flags: <defaults>
</compile_context>

<pallas_src>
import functools

import jax
import jax.numpy as jnp
from jax.experimental import pallas as pl
from jax.experimental.pallas import tpu as pltpu


def _round_up(n, m):
    return ((n + m - 1) // m) * m


def _pick_divisor_tile(total, requested, quantum=128):
    """Largest multiple of `quantum` that divides `total` and is <= max(requested, quantum)."""
    requested = max(requested, quantum)
    best = quantum
    t = quantum
    while t <= min(requested, total):
        if total % t == 0:
            best = t
        t += quantum
    return best


def _vmem_limit_bytes():
    """~75% of physical VMEM (96 MiB on 128-MiB chips, 48 MiB on v7x); 48 MiB fallback."""
    cap = None
    try:
        cap = getattr(pltpu.get_tpu_info(), "vmem_capacity_bytes", None)
    except Exception:
        cap = None
    if not cap:
        cap = 64 * 1024 * 1024
    return int(cap) * 3 // 4


# ----------------------------- kernels -------------------------------------


def _ffn_resident_kernel(x_ref, w1_ref, b1_ref, w2_ref, b2_ref, o_ref):
    # Weights fully resident in VMEM (constant index_map -> DMA'd once for the call).
    h = jnp.dot(x_ref[...], w1_ref[...], preferred_element_type=jnp.float32)
    h = jnp.maximum(h + b1_ref[...].astype(jnp.float32), 0.0)        # bias + ReLU
    # dropout (eval mode) == identity
    y = jnp.dot(h.astype(w2_ref.dtype), w2_ref[...], preferred_element_type=jnp.float32)
    o_ref[...] = (y + b2_ref[...].astype(jnp.float32)).astype(o_ref.dtype)


def _ffn_stream_kernel_f32out(x_ref, w1_ref, b1_ref, w2_ref, b2_ref, o_ref):
    # Hidden axis streamed; accumulate directly into the f32 output block
    # (saves a (tm, in_p) f32 VMEM scratch -- headroom on v7x).
    k = pl.program_id(1)

    @pl.when(k == 0)
    def _init():
        o_ref[...] = jnp.zeros_like(o_ref)

    h = jnp.dot(x_ref[...], w1_ref[...], preferred_element_type=jnp.float32)
    h = jnp.maximum(h + b1_ref[...].astype(jnp.float32), 0.0)        # bias + ReLU
    # dropout (eval mode) == identity
    o_ref[...] += jnp.dot(h.astype(w2_ref.dtype), w2_ref[...],
                          preferred_element_type=jnp.float32)

    @pl.when(k == pl.num_programs(1) - 1)
    def _finalize():
        o_ref[...] += b2_ref[...].astype(o_ref.dtype)


def _ffn_stream_kernel_acc(x_ref, w1_ref, b1_ref, w2_ref, b2_ref, o_ref, acc_ref):
    # Streaming path with an f32 scratch accumulator (for non-f32 output dtypes).
    k = pl.program_id(1)

    @pl.when(k == 0)
    def _init():
        acc_ref[...] = jnp.zeros_like(acc_ref)

    h = jnp.dot(x_ref[...], w1_ref[...], preferred_element_type=jnp.float32)
    h = jnp.maximum(h + b1_ref[...].astype(jnp.float32), 0.0)
    acc_ref[...] += jnp.dot(h.astype(w2_ref.dtype), w2_ref[...],
                            preferred_element_type=jnp.float32)

    @pl.when(k == pl.num_programs(1) - 1)
    def _finalize():
        o_ref[...] = (acc_ref[...] + b2_ref[...].astype(jnp.float32)).astype(o_ref.dtype)


# ----------------------------- wrapper --------------------------------------


def prepare_params(w1, b1, w2, b2, *, mxu_dtype=None):
    """Pad weights/biases to lane-dense multiples of 128 and cast ONCE (outside the hot path).

    w1: [in, hidden], b1: [hidden], w2: [hidden, in], b2: [in]
    (weights transposed relative to PyTorch's nn.Linear [out, in] storage).
    """
    in_feats, hidden = w1.shape
    if mxu_dtype is None:
        # f32 matmul on the MXU is multi-pass emulation; feed bf16 operands, accumulate f32.
        mxu_dtype = jnp.bfloat16 if w1.dtype == jnp.float32 else w1.dtype
    in_p = _round_up(in_feats, 128)
    hid_p = _round_up(hidden, 128)
    w1p = jnp.pad(w1, ((0, in_p - in_feats), (0, hid_p - hidden))).astype(mxu_dtype)
    w2p = jnp.pad(w2, ((0, hid_p - hidden), (0, in_p - in_feats))).astype(mxu_dtype)
    b1p = jnp.pad(b1.reshape(1, -1), ((0, 0), (0, hid_p - hidden))).astype(jnp.float32)
    b2p = jnp.pad(b2.reshape(1, -1), ((0, 0), (0, in_p - in_feats))).astype(jnp.float32)
    return w1p, b1p, w2p, b2p


@functools.partial(jax.jit, static_argnames=("tm", "th", "mode", "vmem_limit_bytes"))
def feedforward(x, w1p, b1p, w2p, b2p, *, tm=512, th=512, mode="auto",
                vmem_limit_bytes=None):
    """relu(x @ w1 + b1) -> dropout(eval=identity) -> @ w2 + b2.

    x: [B, S, in_feats]; w*/b* must come from prepare_params() (padded, lane-dense).
    tm: token tile (intensity knob); th: hidden-reduction tile (streaming path).
    """
    B, S, in_feats = x.shape
    M = B * S
    in_p, hid_p = w1p.shape
    assert w2p.shape == (hid_p, in_p) and in_feats <= in_p
    out_dtype = x.dtype

    if vmem_limit_bytes is None:
        vmem_limit_bytes = _vmem_limit_bytes()
    budget = int(vmem_limit_bytes * 0.85)      # headroom for compiler-internal scratch

    xsz = jnp.dtype(w1p.dtype).itemsize        # x is cast to the MXU dtype
    wsz = jnp.dtype(w1p.dtype).itemsize
    osz = jnp.dtype(out_dtype).itemsize

    # Token tile: keep >= 2 tiles so the "parallel" axis feeds both v7x TensorCores.
    tm = max(8, _round_up(tm, 8))
    tm = min(tm, _round_up(max((M + 1) // 2, 8), 8))

    def resident_bytes(tm_):
        return (2 * tm_ * in_p * xsz            # x (double-buffered)
                + 2 * in_p * hid_p * wsz        # w1
                + 2 * hid_p * in_p * wsz        # w2
                + 2 * (hid_p + in_p) * 4        # biases
                + 2 * tm_ * in_p * osz          # out
                + tm_ * hid_p * 4)              # f32 hidden temp

    def stream_bytes(tm_, th_, with_acc):
        b = (2 * tm_ * in_p * xsz
             + 2 * in_p * th_ * wsz + 2 * th_ * in_p * wsz
             + 2 * (th_ + in_p) * 4
             + 2 * tm_ * in_p * osz
             + tm_ * th_ * 4)                   # f32 hidden-slice temp
        if with_acc:
            b += tm_ * in_p * 4
        return b

    if mode == "auto":
        use_resident = resident_bytes(min(tm, 64)) <= budget
    else:
        use_resident = (mode == "resident")

    use_acc = (out_dtype != jnp.float32)
    if use_resident:
        while tm > 64 and resident_bytes(tm) > budget:
            tm = max(64, _round_up(tm // 2, 8))
    else:
        th = _pick_divisor_tile(hid_p, th)
        while th > 128 and stream_bytes(tm, th, use_acc) > budget:
            th = _pick_divisor_tile(hid_p, th // 2)
        while tm > 64 and stream_bytes(tm, th, use_acc) > budget:
            tm = max(64, _round_up(tm // 2, 8))

    M_p = _round_up(M, tm)
    x2d = x.reshape(M, in_feats).astype(w1p.dtype)
    x2d = jnp.pad(x2d, ((0, M_p - M), (0, in_p - in_feats)))
    n_i = M_p // tm

    if use_resident:
        out2d = pl.pallas_call(
            _ffn_resident_kernel,
            out_shape=jax.ShapeDtypeStruct((M_p, in_p), out_dtype),
            grid_spec=pltpu.PrefetchScalarGridSpec(
                num_scalar_prefetch=0,
                grid=(n_i,),
                in_specs=[
                    pl.BlockSpec((tm, in_p), lambda i: (i, 0)),      # x token tile
                    pl.BlockSpec((in_p, hid_p), lambda i: (0, 0)),   # w1 (resident)
                    pl.BlockSpec((1, hid_p), lambda i: (0, 0)),      # b1
                    pl.BlockSpec((hid_p, in_p), lambda i: (0, 0)),   # w2 (resident)
                    pl.BlockSpec((1, in_p), lambda i: (0, 0)),       # b2
                ],
                out_specs=pl.BlockSpec((tm, in_p), lambda i: (i, 0)),
            ),
            compiler_params=pltpu.CompilerParams(
                dimension_semantics=("parallel",),
                vmem_limit_bytes=vmem_limit_bytes,
            ),
        )(x2d, w1p, b1p, w2p, b2p)
    else:
        kernel = _ffn_stream_kernel_acc if use_acc else _ffn_stream_kernel_f32out
        scratch = [pltpu.VMEM((tm, in_p), jnp.float32)] if use_acc else []
        out2d = pl.pallas_call(
            kernel,
            out_shape=jax.ShapeDtypeStruct((M_p, in_p), out_dtype),
            grid_spec=pltpu.PrefetchScalarGridSpec(
                num_scalar_prefetch=0,
                grid=(n_i, hid_p // th),
                in_specs=[
                    pl.BlockSpec((tm, in_p), lambda i, k: (i, 0)),   # x token tile
                    pl.BlockSpec((in_p, th), lambda i, k: (0, k)),   # w1 hidden slice
                    pl.BlockSpec((1, th), lambda i, k: (0, k)),      # b1 hidden slice
                    pl.BlockSpec((th, in_p), lambda i, k: (k, 0)),   # w2 hidden slice
                    pl.BlockSpec((1, in_p), lambda i, k: (0, 0)),    # b2
                ],
                out_specs=pl.BlockSpec((tm, in_p), lambda i, k: (i, 0)),
                scratch_shapes=scratch,
            ),
            compiler_params=pltpu.CompilerParams(
                dimension_semantics=("parallel", "arbitrary"),
                vmem_limit_bytes=vmem_limit_bytes,
            ),
        )(x2d, w1p, b1p, w2p, b2p)

    return out2d[:M, :in_feats].reshape(B, S, in_feats)


# ----------------------------- test harness ---------------------------------


def init_params(key, in_feats, out_feats, dtype=jnp.float32):
    """Deterministic nn.Linear-style init; weights returned as [in, out]."""
    k1, k2, k3, k4 = jax.random.split(key, 4)
    bound1 = 1.0 / (in_feats ** 0.5)
    bound2 = 1.0 / (out_feats ** 0.5)
    w1 = jax.random.uniform(k1, (in_feats, out_feats), dtype, -bound1, bound1)
    b1 = jax.random.uniform(k2, (out_feats,), dtype, -bound1, bound1)
    w2 = jax.random.uniform(k3, (out_feats, in_feats), dtype, -bound2, bound2)
    b2 = jax.random.uniform(k4, (in_feats,), dtype, -bound2, bound2)
    return w1, b1, w2, b2


def _reference(x, w1, b1, w2, b2, compute_dtype):
    """f32 reference with operands rounded to the kernel's MXU dtype."""
    B, S, in_feats = x.shape
    f32 = jnp.float32
    dot = functools.partial(jnp.dot, precision=jax.lax.Precision.HIGHEST)
    xc = x.astype(compute_dtype).astype(f32).reshape(-1, in_feats)
    w1c = w1.astype(compute_dtype).astype(f32)
    w2c = w2.astype(compute_dtype).astype(f32)
    h = jnp.maximum(dot(xc, w1c) + b1.astype(f32), 0.0)
    h = h.astype(compute_dtype).astype(f32)     # kernel feeds h to the MXU in compute dtype
    y = dot(h, w2c) + b2.astype(f32)
    return y.reshape(B, S, in_feats)


if __name__ == "__main__":
    key = jax.random.PRNGKey(0)

    def check(y, ref, atol=2e-2, rtol=2e-2):
        diff = jnp.max(jnp.abs(y.astype(jnp.float32) - ref))
        assert jnp.allclose(y.astype(jnp.float32), ref, atol=atol, rtol=rtol), float(diff)

    # 1) Small toy case (exercises padding + the weight-resident path).
    kx, kp, key = jax.random.split(key, 3)
    B, S, in_feats, out_feats = 2, 8, 32, 64
    x = jax.random.normal(kx, (B, S, in_feats), jnp.float32)
    w1, b1, w2, b2 = init_params(kp, in_feats, out_feats)
    params = prepare_params(w1, b1, w2, b2)                 # bf16 MXU operands by default
    y = jax.block_until_ready(feedforward(x, *params))
    assert y.shape == (B, S, in_feats) and y.dtype == x.dtype
    check(y, _reference(x, w1, b1, w2, b2, jnp.bfloat16))

    # 2) Lane-dense case, auto (weight-resident) path with a real hidden dim.
    kx2, kp2, key = jax.random.split(key, 3)
    B2, S2, in2, out2 = 2, 64, 128, 1024
    x2 = jax.random.normal(kx2, (B2, S2, in2), jnp.float32)
    w1b, b1b, w2b, b2b = init_params(kp2, in2, out2)
    params2 = prepare_params(w1b, b1b, w2b, b2b)
    ref2 = _reference(x2, w1b, b1b, w2b, b2b, jnp.bfloat16)
    y2 = jax.block_until_ready(feedforward(x2, *params2))
    check(y2, ref2)

    # 3) Forced hidden-streaming path (f32 output -> accumulate directly into o_ref).
    y3 = jax.block_until_ready(feedforward(x2, *params2, mode="stream", th=512))
    check(y3, ref2)

    # 4) bf16 activations -> streaming path with the f32 scratch accumulator.
    x4 = x2.astype(jnp.bfloat16)
    y4 = jax.block_until_ready(feedforward(x4, *params2, mode="stream", th=256))
    check(y4, _reference(x4, w1b, b1b, w2b, b2b, jnp.bfloat16), atol=3e-2, rtol=3e-2)

    print("KERNEL_OK")
</pallas_src>

<mosaic_0001>
module attributes {stable_mosaic.version = 11 : i64} {
  func.func @_ffn_resident_kernel(%arg0: i32, %arg1: memref<8x128xbf16, #tpu.memory_space<vmem>>, %arg2: memref<128x128xbf16, #tpu.memory_space<vmem>>, %arg3: memref<1x128xf32, #tpu.memory_space<vmem>>, %arg4: memref<128x128xbf16, #tpu.memory_space<vmem>>, %arg5: memref<1x128xf32, #tpu.memory_space<vmem>>, %arg6: memref<8x128xf32, #tpu.memory_space<vmem>>) attributes {dimension_semantics = [#tpu.dimension_semantics<parallel>], iteration_bounds = array<i64: 2>, scalar_prefetch = 0 : i64, scratch_operands = 0 : i64, tpu.core_type = #tpu.core_type<tc>, window_params = [{transform_indices = @transform_0, window_bounds = array<i64: 8, 128>}, {pipeline_mode = #tpu.pipeline_mode<synchronous>, transform_indices = @transform_1, window_bounds = array<i64: 128, 128>}, {pipeline_mode = #tpu.pipeline_mode<synchronous>, transform_indices = @transform_2, window_bounds = array<i64: 1, 128>}, {pipeline_mode = #tpu.pipeline_mode<synchronous>, transform_indices = @transform_3, window_bounds = array<i64: 128, 128>}, {pipeline_mode = #tpu.pipeline_mode<synchronous>, transform_indices = @transform_4, window_bounds = array<i64: 1, 128>}, {transform_indices = @transform_5, window_bounds = array<i64: 8, 128>}]} {
    %c0 = arith.constant 0 : index
    %c0_0 = arith.constant 0 : index
    %0 = vector.load %arg1[%c0, %c0_0] : memref<8x128xbf16, #tpu.memory_space<vmem>>, vector<8x128xbf16>
    %c0_1 = arith.constant 0 : index
    %c0_2 = arith.constant 0 : index
    %1 = vector.load %arg2[%c0_1, %c0_2] : memref<128x128xbf16, #tpu.memory_space<vmem>>, vector<128x128xbf16>
    %cst = arith.constant dense<0.000000e+00> : vector<8x128xf32>
    %2 = tpu.matmul %0, %1, %cst {dimension_numbers = #tpu.dot_dimension_numbers<[1], [0], [0], [1], [0, 0, 1, 1], [], []>} : vector<8x128xbf16>, vector<128x128xbf16>, vector<8x128xf32> -> vector<8x128xf32>
    %c0_3 = arith.constant 0 : index
    %c0_4 = arith.constant 0 : index
    %3 = vector.load %arg3[%c0_3, %c0_4] : memref<1x128xf32, #tpu.memory_space<vmem>>, vector<1x128xf32>
    %4 = vector.broadcast %3 : vector<1x128xf32> to vector<8x128xf32>
    %5 = arith.addf %2, %4 : vector<8x128xf32>
    %cst_5 = arith.constant 0.000000e+00 : f32
    %6 = vector.broadcast %cst_5 : f32 to vector<8x128xf32>
    %7 = arith.maximumf %5, %6 : vector<8x128xf32>
    %8 = arith.truncf %7 : vector<8x128xf32> to vector<8x128xbf16>
    %c0_6 = arith.constant 0 : index
    %c0_7 = arith.constant 0 : index
    %9 = vector.load %arg4[%c0_6, %c0_7] : memref<128x128xbf16, #tpu.memory_space<vmem>>, vector<128x128xbf16>
    %cst_8 = arith.constant dense<0.000000e+00> : vector<8x128xf32>
    %10 = tpu.matmul %8, %9, %cst_8 {dimension_numbers = #tpu.dot_dimension_numbers<[1], [0], [0], [1], [0, 0, 1, 1], [], []>} : vector<8x128xbf16>, vector<128x128xbf16>, vector<8x128xf32> -> vector<8x128xf32>
    %c0_9 = arith.constant 0 : index
    %c0_10 = arith.constant 0 : index
    %11 = vector.load %arg5[%c0_9, %c0_10] : memref<1x128xf32, #tpu.memory_space<vmem>>, vector<1x128xf32>
    %12 = vector.broadcast %11 : vector<1x128xf32> to vector<8x128xf32>
    %13 = arith.addf %10, %12 : vector<8x128xf32>
    %c0_11 = arith.constant 0 : index
    %c0_12 = arith.constant 0 : index
    %14 = vector.load %arg6[%c0_11, %c0_12] : memref<8x128xf32, #tpu.memory_space<vmem>>, vector<8x128xf32>
    tpu.vector_store %arg6[%c0_11, %c0_12], %13 {strides = array<i32>} : memref<8x128xf32, #tpu.memory_space<vmem>>, vector<8x128xf32>,
    return
  }
  func.func @transform_0(%arg0: i32) -> (i32, i32) {
    %c0_i32 = arith.constant 0 : i32
    %c0_i32_0 = arith.constant 0 : i32
    return %arg0, %c0_i32 : i32, i32
  }
  func.func @transform_1(%arg0: i32) -> (i32, i32) {
    %c0_i32 = arith.constant 0 : i32
    %c0_i32_0 = arith.constant 0 : i32
    %c0_i32_1 = arith.constant 0 : i32
    return %c0_i32, %c0_i32_0 : i32, i32
  }
  func.func @transform_2(%arg0: i32) -> (i32, i32) {
    %c0_i32 = arith.constant 0 : i32
    %c0_i32_0 = arith.constant 0 : i32
    %c0_i32_1 = arith.constant 0 : i32
    return %c0_i32, %c0_i32_0 : i32, i32
  }
  func.func @transform_3(%arg0: i32) -> (i32, i32) {
    %c0_i32 = arith.constant 0 : i32
    %c0_i32_0 = arith.constant 0 : i32
    %c0_i32_1 = arith.constant 0 : i32
    return %c0_i32, %c0_i32_0 : i32, i32
  }
  func.func @transform_4(%arg0: i32) -> (i32, i32) {
    %c0_i32 = arith.constant 0 : i32
    %c0_i32_0 = arith.constant 0 : i32
    %c0_i32_1 = arith.constant 0 : i32
    return %c0_i32, %c0_i32_0 : i32, i32
  }
  func.func @transform_5(%arg0: i32) -> (i32, i32) {
    %c0_i32 = arith.constant 0 : i32
    %c0_i32_0 = arith.constant 0 : i32
    return %arg0, %c0_i32 : i32, i32
  }
}

</mosaic_0001>

<llo_original>
// kernel: feedforward.1
$region0: #{feedforward.1}
  #allocation0 [shape = 'u32[]', space=smem, size = 0x4, offset = 0x4, fixed_abs, tag = 'smem constant byte address 0x4 - core index']
  #allocation1 [shape = 'u32[144,128]{1,0:T(1,128)}', space=vmem, size = 0x12000, scoped, tag = 'internal scratch']
  %s0 = inlined_call_operand.vmem [shape: bf16[16,128], index: 0, kind: input, shape index: {}]
  %s1 = inlined_call_operand.hbm [shape: bf16[128,128], index: 1, kind: input, shape index: {}]
  %s2 = inlined_call_operand.vmem [shape: f32[1,128], index: 2, kind: input, shape index: {}]
  %s3 = inlined_call_operand.hbm [shape: bf16[128,128], index: 3, kind: input, shape index: {}]
  %s4 = inlined_call_operand.vmem [shape: f32[1,128], index: 4, kind: input, shape index: {}]
  %s5 = inlined_call_operand.vmem [shape: f32[16,128], index: 5, kind: output, shape index: {}]
  %s6 = sld [smem:[#allocation0]]
  $region61: #{feedforward.1} parent=0
    _
  %s8 = ssub.s32 1, %s6
  %s9 = scalar_select 0, %s8, %s6
  $region1: #{feedforward.1} parent=0
    #allocation2 [shape = 'u8[32768]{0}', space=vmem, size = 0x8000, scoped, tag = 'input window, operand 1, single buffered']
    #allocation3 [shape = 's32[2]{0}', space=sflag, size = 0x8, scoped, tag = 'scoped memory for feedforward.1']
    #allocation4 [shape = 'u8[32768]{0}', space=vmem, size = 0x8000, scoped, tag = 'input window, operand 3, single buffered']
    #allocation5 [shape = 's32[1]{0}', space=sflag, size = 0x4, scoped, tag = 'scoped memory for feedforward.1']
    %10 = vsyncpa [#allocation3], 0
    %11 = vsyncpa [#allocation5], 0
    loop: start=0, step=1, limit=4
    $region2: #{feedforward.1} parent=1 // loop_pre_header
      _
    $region3: #{feedforward.1} parent=1 // loop_header
      %s13 = sphi 0, %s17
      %p14 = scmp.ge.s32.totalorder %s13, 4
      %s23 = sphi 0, %s25
      %s26 = sphi 0, %s23
      %s27 = sphi 0, %s26
      %s43 = sphi 0, %s27
      %s47 = sphi 0, %s47
      %s49 = sphi 0, %s47
      %s50 = sphi 0, %s49
      %s64 = sphi 0, %s50
      %s68 = sphi 0, %s68
      %s70 = sphi 0, %s68
      %s71 = sphi 0, %s70
      %s85 = sphi 0, %s71
      %s89 = sphi 0, %s89
      %s91 = sphi 0, %s89
      %s92 = sphi 0, %s91
      %s106 = sphi 0, %s92
      %s110 = sphi 0, %s110
      %s112 = sphi 0, %s110
      %s113 = sphi 0, %s112
      %s127 = sphi 0, %s113
      %s133 = sphi 0, %s135
      %s136 = sphi 0, %s133
      %s137 = sphi 0, %s136
      %s153 = sphi 0, %s137
    $region4: #{feedforward.1} parent=1 // loop_header_branch
      %16 = sbr.rel (%p14) target = $region8
    $region5: #{feedforward.1} parent=1 // loop_body
      %s18 = ssub.s32 %s13, 1
      %s19 = ssub.s32 %s13, 2
      %s20 = sadd.s32 %s13, 1
      %s21 = ssub.s32 %s13, %s20
      %p22 = scmp.eq.s32.totalorder %s21, 0
      %s24 = sadd.s32 %s23, 1
      %s25 = scalar_select %p22, %s23, %s24
      %p28 = pneg %p22
      %p29 = scmp.eq.s32.totalorder %s13, 1
      %p30 = por %p28, %p29
      %p31 = scmp.ne.s32.totalorder %s23, %s26
      %p32 = scmp.eq.s32.totalorder %s13, 0
      %p33 = por %p31, %p32
      %p34 = scmp.ne.s32.totalorder %s23, %s26
      %p35 = scmp.eq.s32.totalorder %s18, 1
      %p36 = por %p34, %p35
      %p37 = scmp.ne.s32.totalorder %s26, %s27
      %p38 = scmp.eq.s32.totalorder %s18, 0
      %p39 = por %p37, %p38
      %p40 = scmp.ne.s32.totalorder %s26, %s27
      %p41 = scmp.eq.s32.totalorder %s19, 1
      %p42 = por %p40, %p41
      %p44 = scmp.ne.s32.totalorder %s27, %s43
      %p45 = scmp.eq.s32.totalorder %s19, 0
      %p46 = por %p44, %p45
      %s48 = sadd.s32 %s47, 1
      %p51 = scmp.eq.s32.totalorder %s13, 1
      %p52 = scmp.ne.s32.totalorder %s47, %s49
      %p53 = scmp.eq.s32.totalorder %s13, 0
      %p54 = por %p52, %p53
      %p55 = scmp.ne.s32.totalorder %s47, %s49
      %p56 = scmp.eq.s32.totalorder %s18, 1
      %p57 = por %p55, %p56
      %p58 = scmp.ne.s32.totalorder %s49, %s50
      %p59 = scmp.eq.s32.totalorder %s18, 0
      %p60 = por %p58, %p59
      %p61 = scmp.ne.s32.totalorder %s49, %s50
      %p62 = scmp.eq.s32.totalorder %s19, 1
      %p63 = por %p61, %p62
      %p65 = scmp.ne.s32.totalorder %s50, %s64
      %p66 = scmp.eq.s32.totalorder %s19, 0
      %p67 = por %p65, %p66
      %s69 = sadd.s32 %s68, 1
      %p72 = scmp.eq.s32.totalorder %s13, 1
      %p73 = scmp.ne.s32.totalorder %s68, %s70
      %p74 = scmp.eq.s32.totalorder %s13, 0
      %p75 = por %p73, %p74
      %p76 = scmp.ne.s32.totalorder %s68, %s70
      %p77 = scmp.eq.s32.totalorder %s18, 1
      %p78 = por %p76, %p77
      %p79 = scmp.ne.s32.totalorder %s70, %s71
      %p80 = scmp.eq.s32.totalorder %s18, 0
      %p81 = por %p79, %p80
      %p82 = scmp.ne.s32.totalorder %s70, %s71
      %p83 = scmp.eq.s32.totalorder %s19, 1
      %p84 = por %p82, %p83
      %p86 = scmp.ne.s32.totalorder %s71, %s85
      %p87 = scmp.eq.s32.totalorder %s19, 0
      %p88 = por %p86, %p87
      %s90 = sadd.s32 %s89, 1
      %p93 = scmp.eq.s32.totalorder %s13, 1
      %p94 = scmp.ne.s32.totalorder %s89, %s91
      %p95 = scmp.eq.s32.totalorder %s13, 0
      %p96 = por %p94, %p95
      %p97 = scmp.ne.s32.totalorder %s89, %s91
      %p98 = scmp.eq.s32.totalorder %s18, 1
      %p99 = por %p97, %p98
      %p100 = scmp.ne.s32.totalorder %s91, %s92
      %p101 = scmp.eq.s32.totalorder %s18, 0
      %p102 = por %p100, %p101
      %p103 = scmp.ne.s32.totalorder %s91, %s92
      %p104 = scmp.eq.s32.totalorder %s19, 1
      %p105 = por %p103, %p104
      %p107 = scmp.ne.s32.totalorder %s92, %s106
      %p108 = scmp.eq.s32.totalorder %s19, 0
      %p109 = por %p107, %p108
      %s111 = sadd.s32 %s110, 1
      %p114 = scmp.eq.s32.totalorder %s13, 1
      %p115 = scmp.ne.s32.totalorder %s110, %s112
      %p116 = scmp.eq.s32.totalorder %s13, 0
      %p117 = por %p115, %p116
      %p118 = scmp.ne.s32.totalorder %s110, %s112
      %p119 = scmp.eq.s32.totalorder %s18, 1
      %p120 = por %p118, %p119
      %p121 = scmp.ne.s32.totalorder %s112, %s113
      %p122 = scmp.eq.s32.totalorder %s18, 0
      %p123 = por %p121, %p122
      %p124 = scmp.ne.s32.totalorder %s112, %s113
      %p125 = scmp.eq.s32.totalorder %s19, 1
      %p126 = por %p124, %p125
      %p128 = scmp.ne.s32.totalorder %s113, %s127
      %p129 = scmp.eq.s32.totalorder %s19, 0
      %p130 = por %p128, %p129
      %s131 = ssub.s32 %s13, %s20
      %p132 = scmp.eq.s32.totalorder %s131, 0
      %s134 = sadd.s32 %s133, 1
      %s135 = scalar_select %p132, %s133, %s134
      %p138 = pneg %p132
      %p139 = scmp.eq.s32.totalorder %s13, 1
      %p140 = por %p138, %p139
      %p141 = scmp.ne.s32.totalorder %s133, %s136
      %p142 = scmp.eq.s32.totalorder %s13, 0
      %p143 = por %p141, %p142
      %p144 = scmp.ne.s32.totalorder %s133, %s136
      %p145 = scmp.eq.s32.totalorder %s18, 1
      %p146 = por %p144, %p145
      %p147 = scmp.ne.s32.totalorder %s136, %s137
      %p148 = scmp.eq.s32.totalorder %s18, 0
      %p149 = por %p147, %p148
      %p150 = scmp.ne.s32.totalorder %s136, %s137
      %p151 = scmp.eq.s32.totalorder %s19, 1
      %p152 = por %p150, %p151
      %p154 = scmp.ne.s32.totalorder %s137, %s153
      %p155 = scmp.eq.s32.totalorder %s19, 0
      %p156 = por %p154, %p155
      %p157 = scmp.le.s32.totalorder 1, %s13
      %p158 = scmp.lt.s32.totalorder %s13, 3
      %p159 = pnand %p157, %p158
      %p160 = pneg %p159
      // Predicated region
      $region9: #{feedforward.1} parent=5 // pred_check
        _
      $region10: #{feedforward.1} parent=5 // pred_check_branch
        %162 = sbr.rel (%p159) target = $region12
      $region11: #{feedforward.1} parent=5 // pred_region
        %s163 = ssub.s32 %s13, 1
        // Predicated region
        $region13: #{feedforward.1} parent=11 // pred_check
          %p164 = pneg %p60
        $region14: #{feedforward.1} parent=11 // pred_check_branch
          %166 = sbr.rel (%p164) target = $region16
        $region15: #{feedforward.1} parent=11 // pred_region
          %s168 = ssub.s32 1024, 1024
          %169 = vsyncadd [#allocation3], %s168
          %s170 = sshll.u32 [#allocation2], 4
          %s171 = int_to_ptr.vmem [resolvable:$true] %s170
          %176 = dma.hbm_to_vmem [thread:$0]  %s1, 1024, %s171, [#allocation3], 64, 64, 4
        $region16: #{feedforward.1} parent=11 // pred_fallthru
          _
        // Predicated region
        $region17: #{feedforward.1} parent=11 // pred_check
          %p177 = pneg %p81
        $region18: #{feedforward.1} parent=11 // pred_check_branch
          %179 = sbr.rel (%p177) target = $region20
        $region19: #{feedforward.1} parent=11 // pred_region
          _
        $region20: #{feedforward.1} parent=11 // pred_fallthru
          _
        // Predicated region
        $region21: #{feedforward.1} parent=11 // pred_check
          %p180 = pneg %p102
        $region22: #{feedforward.1} parent=11 // pred_check_branch
          %182 = sbr.rel (%p180) target = $region24
        $region23: #{feedforward.1} parent=11 // pred_region
          %s184 = ssub.s32 1024, 1024
          %185 = vsyncadd [#allocation5], %s184
          %s186 = sshll.u32 [#allocation4], 4
          %s187 = int_to_ptr.vmem [resolvable:$true] %s186
          %192 = dma.hbm_to_vmem [thread:$0]  %s3, 1024, %s187, [#allocation5], 64, 64, 4
        $region24: #{feedforward.1} parent=11 // pred_fallthru
          _
        // Predicated region
        $region25: #{feedforward.1} parent=11 // pred_check
          %p193 = pneg %p123
        $region26: #{feedforward.1} parent=11 // pred_check_branch
          %195 = sbr.rel (%p193) target = $region28
        $region27: #{feedforward.1} parent=11 // pred_region
          _
        $region28: #{feedforward.1} parent=11 // pred_fallthru
          _
      $region12: #{feedforward.1} parent=5 // pred_fallthru
        _
      %p196 = scmp.lt.s32.totalorder %s13, 2
      // Predicated region
      $region29: #{feedforward.1} parent=5 // pred_check
        %p197 = pneg %p196
      $region30: #{feedforward.1} parent=5 // pred_check_branch
        %199 = sbr.rel (%p197) target = $region32
      $region31: #{feedforward.1} parent=5 // pred_region
        // Predicated region
        $region33: #{feedforward.1} parent=31 // pred_check
          %p200 = pneg %p33
        $region34: #{feedforward.1} parent=31 // pred_check_branch
          %202 = sbr.rel (%p200) target = $region36
        $region35: #{feedforward.1} parent=31 // pred_region
          %p203 = scmp.lt.s32.totalorder %s13, 1
          %s204 = scalar_select %p203, %s13, 1
          %s205 = smul.addr %s204, 4
          %s206 = scalar_lea.vmem %s0, %s205
        $region36: #{feedforward.1} parent=31 // pred_fallthru
          _
      $region32: #{feedforward.1} parent=5 // pred_fallthru
        _
      %p207 = scmp.le.s32.totalorder 1, %s13
      %p208 = scmp.lt.s32.totalorder %s13, 3
      %p209 = pnand %p207, %p208
      %p210 = pneg %p209
      // Predicated region
      $region37: #{feedforward.1} parent=5 // pred_check
        _
      $region38: #{feedforward.1} parent=5 // pred_check_branch
        %212 = sbr.rel (%p209) target = $region40
      $region39: #{feedforward.1} parent=5 // pred_region
        %s213 = ssub.s32 %s13, 1
        // Predicated region
        $region41: #{feedforward.1} parent=39 // pred_check
          %p214 = pneg %p60
        $region42: #{feedforward.1} parent=39 // pred_check_branch
          %216 = sbr.rel (%p214) target = $region44
        $region43: #{feedforward.1} parent=39 // pred_region
          %217 = dma.done [#allocation3], 1024
        $region44: #{feedforward.1} parent=39 // pred_fallthru
          _
        // Predicated region
        $region45: #{feedforward.1} parent=39 // pred_check
          %p218 = pneg %p102
        $region46: #{feedforward.1} parent=39 // pred_check_branch
          %220 = sbr.rel (%p218) target = $region48
        $region47: #{feedforward.1} parent=39 // pred_region
          %221 = dma.done [#allocation5], 1024
        $region48: #{feedforward.1} parent=39 // pred_fallthru
          _
        %p222 = scmp.lt.s32.totalorder %s18, 1
        %s223 = scalar_select %p222, %s18, 1
        %s224 = smul.addr %s223, 4
        %s225 = scalar_lea.vmem %s0, %s224
        %p226 = pneg %p39
        %p227 = pneg %p36
        %p228 = pneg %p60
        %p229 = pneg %p57
        %p230 = pneg %p81
        %p231 = pneg %p78
        %p232 = pneg %p102
        %p233 = pneg %p99
        %p234 = pneg %p123
        %p235 = pneg %p120
        %p236 = pneg %p149
        %p237 = pneg %p146
        %p238 = scmp.lt.s32.totalorder %s18, 1
        %s239 = scalar_select %p238, %s18, 1
        %s240 = smul.addr %s239, 8
        %s241 = scalar_lea.vmem %s5, %s240
        %p242 = scmp.lt.s32.totalorder %s18, 1
        %s243 = scalar_select %p242, %s18, 1
        %s244 = smul.addr %s243, 4
        %s245 = scalar_lea.vmem %s0, %s244
        %p246 = scmp.lt.s32.totalorder %s18, 1
        %s247 = scalar_select %p246, %s18, 1
        %s248 = smul.addr %s247, 8
        %s249 = scalar_lea.vmem %s5, %s248
        %v251 = vld [vmem:[%s245] sm:$0xf]
        %v252 = vld [vmem:[#allocation2] sm:$0xf]
        %v253 = vld [vmem:[#allocation2 + $0x4] sm:$0xf]
        %v254 = vld [vmem:[#allocation2 + $0x8] sm:$0xf]
        %v255 = vld [vmem:[#allocation2 + $0xc] sm:$0xf]
        %v256 = vld [vmem:[#allocation2 + $0x10] sm:$0xf]
        %v257 = vld [vmem:[#allocation2 + $0x14] sm:$0xf]
        %v258 = vld [vmem:[#allocation2 + $0x18] sm:$0xf]
        %v259 = vld [vmem:[#allocation2 + $0x1c] sm:$0xf]
        %v260 = vld [vmem:[#allocation2 + $0x20] sm:$0xf]
        %v261 = vld [vmem:[#allocation2 + $0x24] sm:$0xf]
        %v262 = vld [vmem:[#allocation2 + $0x28] sm:$0xf]
        %v263 = vld [vmem:[#allocation2 + $0x2c] sm:$0xf]
        %v264 = vld [vmem:[#allocation2 + $0x30] sm:$0xf]
        %v265 = vld [vmem:[#allocation2 + $0x34] sm:$0xf]
        %v266 = vld [vmem:[#allocation2 + $0x38] sm:$0xf]
        %v267 = vld [vmem:[#allocation2 + $0x3c] sm:$0xf]
        %v268 = vld [vmem:[%s2] sm:$0x1]
        %v270 = vlaneseq
        %v271 = vshrl.u32 %v270, 7
        %v272 = vsub.s32 0, %v271
        %v273 = vrot.slane %v268, %v272
        %v291 = vunpack.c.l.b16 %v252
        %v292 = vunpack.c.l.b16 %v253
        %v293 = vunpack.c.l.b16 %v254
        %v294 = vunpack.c.l.b16 %v255
        %v295 = vunpack.c.l.b16 %v256
        %v296 = vunpack.c.l.b16 %v257
        %v297 = vunpack.c.l.b16 %v258
        %v298 = vunpack.c.l.b16 %v259
        %v299 = vunpack.c.l.b16 %v260
        %v300 = vunpack.c.l.b16 %v261
        %v301 = vunpack.c.l.b16 %v262
        %v302 = vunpack.c.l.b16 %v263
        %v303 = vunpack.c.l.b16 %v264
        %v304 = vunpack.c.l.b16 %v265
        %v305 = vunpack.c.l.b16 %v266
        %v306 = vunpack.c.l.b16 %v267
        %v307 = vpack.c.b16 %v292, %v291
        %v308 = vpack.c.b16 %v294, %v293
        %v309 = vpack.c.b16 %v296, %v295
        %v310 = vpack.c.b16 %v298, %v297
        %v311 = vpack.c.b16 %v300, %v299
        %v312 = vpack.c.b16 %v302, %v301
        %v313 = vpack.c.b16 %v304, %v303
        %v314 = vpack.c.b16 %v306, %v305
        %323 = vmatprep.subr.bf16.mxu0 0
        %324 = vmatpush1.bf16.msra.mxu0 %v314
        %325 = vmatprep.subr.bf16.mxu0 0
        %326 = vmatpush1.bf16.msra.mxu0 %v313
        %327 = vmatprep.subr.bf16.mxu0 0
        %328 = vmatpush1.bf16.msra.mxu0 %v312
        %329 = vmatprep.subr.bf16.mxu0 0
        %330 = vmatpush1.bf16.msra.mxu0 %v311
        %331 = vmatprep.subr.bf16.mxu0 0
        %332 = vmatpush1.bf16.msra.mxu0 %v310
        %333 = vmatprep.subr.bf16.mxu0 0
        %334 = vmatpush1.bf16.msra.mxu0 %v309
        %335 = vmatprep.subr.bf16.mxu0 0
        %336 = vmatpush1.bf16.msra.mxu0 %v308
        %337 = vmatprep.subr.bf16.mxu0 0
        %338 = vmatpush1.bf16.msra.mxu0 %v307
        %339 = vmatprep.subr.bf16.mxu0 0
        %340 = vmatpush2.bf16.msra.mxu0 0
        %341 = vmatprep.subr.bf16.mxu0 0
        %342 = vmatpush2.bf16.msra.mxu0 0
        %343 = vmatprep.subr.bf16.mxu0 0
        %344 = vmatpush2.bf16.msra.mxu0 0
        %345 = vmatprep.subr.bf16.mxu0 0
        %346 = vmatpush2.bf16.msra.mxu0 0
        %347 = vmatprep.subr.bf16.mxu0 0
        %348 = vmatpush2.bf16.msra.mxu0 0
        %349 = vmatprep.subr.bf16.mxu0 0
        %350 = vmatpush2.bf16.msra.mxu0 0
        %351 = vmatprep.subr.bf16.mxu0 0
        %352 = vmatpush2.bf16.msra.mxu0 0
        %353 = vmatprep.subr.bf16.mxu0 0
        %354 = vmatpush2.bf16.msra.mxu0 0
        %355 = vmatprep.mubr.bf16.mxu0 0
        %356 = vmatmul.mubr.bf16.gmra.mxu0 %v251
        %v357 = vpop.f32.mrf.mxu0
        %v358 = vadd.f32 %v273, %v357
        %v359 = vpop.f32.mrf.mxu0
        %v360 = vpop.f32.mrf.mxu0
        %v361 = vpop.f32.mrf.mxu0
        %362 = vdwg.mxu0
        %v363 = vmax.f32 %v358, 0.0
        %v364 = vpack.c.bf16 %v363, %v363
        %v365 = vld [vmem:[#allocation4] sm:$0xf]
        %v366 = vld [vmem:[#allocation4 + $0x4] sm:$0xf]
        %v367 = vld [vmem:[#allocation4 + $0x8] sm:$0xf]
        %v368 = vld [vmem:[#allocation4 + $0xc] sm:$0xf]
        %v369 = vld [vmem:[#allocation4 + $0x10] sm:$0xf]
        %v370 = vld [vmem:[#allocation4 + $0x14] sm:$0xf]
        %v371 = vld [vmem:[#allocation4 + $0x18] sm:$0xf]
        %v372 = vld [vmem:[#allocation4 + $0x1c] sm:$0xf]
        %v373 = vld [vmem:[#allocation4 + $0x20] sm:$0xf]
        %v374 = vld [vmem:[#allocation4 + $0x24] sm:$0xf]
        %v375 = vld [vmem:[#allocation4 + $0x28] sm:$0xf]
        %v376 = vld [vmem:[#allocation4 + $0x2c] sm:$0xf]
        %v377 = vld [vmem:[#allocation4 + $0x30] sm:$0xf]
        %v378 = vld [vmem:[#allocation4 + $0x34] sm:$0xf]
        %v379 = vld [vmem:[#allocation4 + $0x38] sm:$0xf]
        %v380 = vld [vmem:[#allocation4 + $0x3c] sm:$0xf]
        %v381 = vld [vmem:[%s4] sm:$0x1]
        %v383 = vlaneseq
        %v384 = vshrl.u32 %v383, 7
        %v385 = vsub.s32 0, %v384
        %v386 = vrot.slane %v381, %v385
        %v404 = vunpack.c.l.b16 %v365
        %v405 = vunpack.c.l.b16 %v366
        %v406 = vunpack.c.l.b16 %v367
        %v407 = vunpack.c.l.b16 %v368
        %v408 = vunpack.c.l.b16 %v369
        %v409 = vunpack.c.l.b16 %v370
        %v410 = vunpack.c.l.b16 %v371
        %v411 = vunpack.c.l.b16 %v372
        %v412 = vunpack.c.l.b16 %v373
        %v413 = vunpack.c.l.b16 %v374
        %v414 = vunpack.c.l.b16 %v375
        %v415 = vunpack.c.l.b16 %v376
        %v416 = vunpack.c.l.b16 %v377
        %v417 = vunpack.c.l.b16 %v378
        %v418 = vunpack.c.l.b16 %v379
        %v419 = vunpack.c.l.b16 %v380
        %v420 = vpack.c.b16 %v405, %v404
        %v421 = vpack.c.b16 %v407, %v406
        %v422 = vpack.c.b16 %v409, %v408
        %v423 = vpack.c.b16 %v411, %v410
        %v424 = vpack.c.b16 %v413, %v412
        %v425 = vpack.c.b16 %v415, %v414
        %v426 = vpack.c.b16 %v417, %v416
        %v427 = vpack.c.b16 %v419, %v418
        %436 = vmatprep.subr.bf16.mxu0 0
        %437 = vmatpush1.bf16.msra.mxu0 %v427
        %438 = vmatprep.subr.bf16.mxu0 0
        %439 = vmatpush1.bf16.msra.mxu0 %v426
        %440 = vmatprep.subr.bf16.mxu0 0
        %441 = vmatpush1.bf16.msra.mxu0 %v425
        %442 = vmatprep.subr.bf16.mxu0 0
        %443 = vmatpush1.bf16.msra.mxu0 %v424
        %444 = vmatprep.subr.bf16.mxu0 0
        %445 = vmatpush1.bf16.msra.mxu0 %v423
        %446 = vmatprep.subr.bf16.mxu0 0
        %447 = vmatpush1.bf16.msra.mxu0 %v422
        %448 = vmatprep.subr.bf16.mxu0 0
        %449 = vmatpush1.bf16.msra.mxu0 %v421
        %450 = vmatprep.subr.bf16.mxu0 0
        %451 = vmatpush1.bf16.msra.mxu0 %v420
        %452 = vmatprep.subr.bf16.mxu0 0
        %453 = vmatpush2.bf16.msra.mxu0 0
        %454 = vmatprep.subr.bf16.mxu0 0
        %455 = vmatpush2.bf16.msra.mxu0 0
        %456 = vmatprep.subr.bf16.mxu0 0
        %457 = vmatpush2.bf16.msra.mxu0 0
        %458 = vmatprep.subr.bf16.mxu0 0
        %459 = vmatpush2.bf16.msra.mxu0 0
        %460 = vmatprep.subr.bf16.mxu0 0
        %461 = vmatpush2.bf16.msra.mxu0 0
        %462 = vmatprep.subr.bf16.mxu0 0
        %463 = vmatpush2.bf16.msra.mxu0 0
        %464 = vmatprep.subr.bf16.mxu0 0
        %465 = vmatpush2.bf16.msra.mxu0 0
        %466 = vmatprep.subr.bf16.mxu0 0
        %467 = vmatpush2.bf16.msra.mxu0 0
        %468 = vmatprep.mubr.bf16.mxu0 0
        %469 = vmatmul.mubr.bf16.gmra.mxu0 %v364
        %v470 = vpop.f32.mrf.mxu0
        %v471 = vadd.f32 %v386, %v470
        %v472 = vpop.f32.mrf.mxu0
        %v473 = vpop.f32.mrf.mxu0
        %v474 = vpop.f32.mrf.mxu0
        %475 = vdwg.mxu0
        %476 = vst [vmem:[%s249] sm:$0xff] %v471
        %p477 = scmp.lt.s32.totalorder %s18, 1
        %s478 = scalar_select %p477, %s18, 1
        %s479 = smul.addr %s478, 8
        %s480 = scalar_lea.vmem %s5, %s479
        // Predicated region
        $region49: #{feedforward.1} parent=39 // pred_check
          %p481 = pneg %p146
        $region50: #{feedforward.1} parent=39 // pred_check_branch
          %483 = sbr.rel (%p481) target = $region52
        $region51: #{feedforward.1} parent=39 // pred_region
          _
        $region52: #{feedforward.1} parent=39 // pred_fallthru
          _
      $region40: #{feedforward.1} parent=5 // pred_fallthru
        _
      %p484 = scmp.le.s32.totalorder 2, %s13
      // Predicated region
      $region53: #{feedforward.1} parent=5 // pred_check
        %p485 = pneg %p484
      $region54: #{feedforward.1} parent=5 // pred_check_branch
        %487 = sbr.rel (%p485) target = $region56
      $region55: #{feedforward.1} parent=5 // pred_region
        %s488 = ssub.s32 %s13, 2
        // Predicated region
        $region57: #{feedforward.1} parent=55 // pred_check
          %p489 = pneg %p152
        $region58: #{feedforward.1} parent=55 // pred_check_branch
          %491 = sbr.rel (%p489) target = $region60
        $region59: #{feedforward.1} parent=55 // pred_region
          %p492 = scmp.lt.s32.totalorder %s19, 1
          %s493 = scalar_select %p492, %s19, 1
          %s494 = smul.addr %s493, 8
          %s495 = scalar_lea.vmem %s5, %s494
        $region60: #{feedforward.1} parent=55 // pred_fallthru
          _
      $region56: #{feedforward.1} parent=5 // pred_fallthru
        _
    $region6: #{feedforward.1} parent=1 // loop_footer
      %s17 = sadd.s32 1, %s13
    $region7: #{feedforward.1} parent=1 // loop_footer_branch
      %12 = sbr.rel target = $region3
    $region8: #{feedforward.1} parent=1 // loop_exit
      _
    %496 = vsyncpa [#allocation3], 1
    %s497 = scalar_lea.sflag [#allocation3], 1
    %498 = vsyncpa %s497, 1
    %499 = vsyncpa [#allocation5], 1

</llo_original>
